<compile_context>
chip_gen: v7x
topology: tpu7x:2x2x1
jax: 0.10.0
libtpu: 0.0.40
codegen_flags: <defaults>
</compile_context>

<pallas_src>
import jax
import jax.numpy as jnp
from jax.experimental import pallas as pl
from jax.experimental.pallas import tpu as pltpu

_SUBLANE = 8
_LANE = 128
_MAX_BLOCK_COLS = 8192  # (8, 8192) f32 block = 256 KiB per buffer


def _fixed_linear_schedule_kernel(coef_ref, t_ref, out_ref):
    # coef_ref: SMEM (2,) f32 -> [gamma_min, scale] with scale = gamma_max - gamma_min
    gamma_min = coef_ref[0]
    scale = coef_ref[1]
    t = t_ref[...].astype(jnp.float32)
    out_ref[...] = (gamma_min + scale * t).astype(out_ref.dtype)


def fixed_linear_schedule(t, gamma_min, gamma_max):
    """Pallas equivalent of FixedLinearSchedule.forward(t). Works for any shape."""
    orig_shape = t.shape
    orig_dtype = t.dtype
    if not jnp.issubdtype(orig_dtype, jnp.floating):
        # TODO(synk): PyTorch promotes integer t to float; we emit float32 in that case.
        orig_dtype = jnp.float32
        t = t.astype(jnp.float32)

    n = t.size
    min_chunk = _SUBLANE * _LANE
    n_pad = pl.cdiv(max(n, 1), min_chunk) * min_chunk
    cols = n_pad // _SUBLANE
    if cols > _MAX_BLOCK_COLS:
        chunk = _SUBLANE * _MAX_BLOCK_COLS
        n_pad = pl.cdiv(n, chunk) * chunk
        cols = n_pad // _SUBLANE
        block_cols = _MAX_BLOCK_COLS
    else:
        block_cols = cols
    grid = (cols // block_cols,)

    t_flat = t.reshape(-1)
    if n_pad != n:
        t_flat = jnp.pad(t_flat, (0, n_pad - n))
    t2d = t_flat.reshape(_SUBLANE, cols)  # sublane-dense, lane dim multiple of 128

    coefs = jnp.array(
        [gamma_min, gamma_max - gamma_min], dtype=jnp.float32
    )  # precomputed scale; tiny SMEM prefetch array

    out2d = pl.pallas_call(
        _fixed_linear_schedule_kernel,
        out_shape=jax.ShapeDtypeStruct((_SUBLANE, cols), orig_dtype),
        grid_spec=pltpu.PrefetchScalarGridSpec(
            num_scalar_prefetch=1,
            grid=grid,
            in_specs=[
                pl.BlockSpec((_SUBLANE, block_cols), lambda i, coef: (0, i)),
            ],
            out_specs=pl.BlockSpec((_SUBLANE, block_cols), lambda i, coef: (0, i)),
        ),
        compiler_params=pltpu.CompilerParams(
            dimension_semantics=("parallel",),
        ),
    )(coefs, t2d)

    return out2d.reshape(-1)[:n].reshape(orig_shape)


if __name__ == "__main__":
    gamma_min = -13.3
    gamma_max = 5.0

    key = jax.random.PRNGKey(0)
    k1, k2, k3 = jax.random.split(key, 3)

    # 1) small diffusion-timestep batch, f32
    t1 = jax.random.uniform(k1, (8,), dtype=jnp.float32)
    y1 = jax.block_until_ready(fixed_linear_schedule(t1, gamma_min, gamma_max))
    y1_ref = gamma_min + (gamma_max - gamma_min) * t1
    assert y1.shape == t1.shape and y1.dtype == t1.dtype
    assert jnp.allclose(y1, y1_ref, atol=1e-6, rtol=1e-6)

    # 2) multi-dim input with ragged size (exercises padding + reshape round-trip)
    t2 = jax.random.uniform(k2, (2, 4, 16), dtype=jnp.float32)
    y2 = jax.block_until_ready(fixed_linear_schedule(t2, gamma_min, gamma_max))
    y2_ref = gamma_min + (gamma_max - gamma_min) * t2
    assert y2.shape == t2.shape and y2.dtype == t2.dtype
    assert jnp.allclose(y2, y2_ref, atol=1e-6, rtol=1e-6)

    # 3) bf16 input stays bf16 in HBM; cast happens in-kernel
    t3 = jax.random.uniform(k3, (32,), dtype=jnp.float32).astype(jnp.bfloat16)
    y3 = jax.block_until_ready(fixed_linear_schedule(t3, gamma_min, gamma_max))
    y3_ref = (gamma_min + (gamma_max - gamma_min) * t3.astype(jnp.float32)).astype(
        jnp.bfloat16
    )
    assert y3.shape == t3.shape and y3.dtype == t3.dtype
    assert jnp.allclose(
        y3.astype(jnp.float32), y3_ref.astype(jnp.float32), atol=1e-1, rtol=1e-2
    )

    print("KERNEL_OK")
</pallas_src>

<mosaic_0001>
module attributes {stable_mosaic.version = 11 : i64} {
  func.func @_fixed_linear_schedule_kernel(%arg0: i32, %arg1: memref<2xf32, #tpu.memory_space<smem>>, %arg2: memref<8x128xf32, #tpu.memory_space<vmem>>, %arg3: memref<8x128xf32, #tpu.memory_space<vmem>>) attributes {dimension_semantics = [#tpu.dimension_semantics<parallel>], iteration_bounds = array<i64: 1>, scalar_prefetch = 1 : i64, scratch_operands = 0 : i64, tpu.core_type = #tpu.core_type<tc>, window_params = [{transform_indices = @transform_0, window_bounds = array<i64: 8, 128>}, {transform_indices = @transform_1, window_bounds = array<i64: 8, 128>}]} {
    %c0 = arith.constant 0 : index
    %0 = memref.load %arg1[%c0] : memref<2xf32, #tpu.memory_space<smem>>
    %c1 = arith.constant 1 : index
    %1 = memref.load %arg1[%c1] : memref<2xf32, #tpu.memory_space<smem>>
    %c0_0 = arith.constant 0 : index
    %c0_1 = arith.constant 0 : index
    %2 = vector.load %arg2[%c0_0, %c0_1] : memref<8x128xf32, #tpu.memory_space<vmem>>, vector<8x128xf32>
    %3 = vector.broadcast %1 : f32 to vector<8x128xf32>
    %4 = arith.mulf %3, %2 : vector<8x128xf32>
    %5 = vector.broadcast %0 : f32 to vector<8x128xf32>
    %6 = arith.addf %5, %4 : vector<8x128xf32>
    %c0_2 = arith.constant 0 : index
    %c0_3 = arith.constant 0 : index
    %7 = vector.load %arg3[%c0_2, %c0_3] : memref<8x128xf32, #tpu.memory_space<vmem>>, vector<8x128xf32>
    tpu.vector_store %arg3[%c0_2, %c0_3], %6 {strides = array<i32>} : memref<8x128xf32, #tpu.memory_space<vmem>>, vector<8x128xf32>,
    return
  }
  func.func @transform_0(%arg0: i32, %arg1: memref<2xf32, #tpu.memory_space<smem>>) -> (i32, i32) {
    %c0_i32 = arith.constant 0 : i32
    %c0_i32_0 = arith.constant 0 : i32
    return %c0_i32, %arg0 : i32, i32
  }
  func.func @transform_1(%arg0: i32, %arg1: memref<2xf32, #tpu.memory_space<smem>>) -> (i32, i32) {
    %c0_i32 = arith.constant 0 : i32
    %c0_i32_0 = arith.constant 0 : i32
    return %c0_i32, %arg0 : i32, i32
  }
}

</mosaic_0001>

<llo_original>
// kernel: tpu_custom_call.1
$region0: #{tpu_custom_call.1}
  #allocation0 [shape = 'u32[]', space=smem, size = 0x4, offset = 0x4, fixed_abs, tag = 'smem constant byte address 0x4 - core index']
  #allocation1 [shape = 'u32[144,128]{1,0:T(1,128)}', space=vmem, size = 0x12000, scoped, tag = 'internal scratch']
  #allocation2 [shape = 's32[1]{0}', space=sflag, size = 0x4, scoped, tag = 'scoped memory for tpu_custom_call.1']
  #allocation3 [shape = 'u8[512]{0}', space=smem, size = 0x200, scoped, tag = 'prefetched SMEM operand 0']
  %s0 = inlined_call_operand.hbm [shape: f32[2], index: 0, kind: input, shape index: {}]
  %s1 = inlined_call_operand.hbm [shape: f32[8,128], index: 1, kind: input, shape index: {}]
  %s2 = inlined_call_operand.hbm [shape: f32[8,128], index: 2, kind: output, shape index: {}]
  %s3 = sld [smem:[#allocation0]]
  $region18: #{tpu_custom_call.1} parent=0
    _
  %s5 = ssub.s32 1, %s3
  %s6 = scalar_select 0, %s5, %s3
  %8 = dma.hbm_to_smem %s0, 16, [#allocation3], [#allocation2]
  %9 = dma.done [#allocation2], 16
  %10 = sfence
  $region1: #{tpu_custom_call.1} parent=0
    #allocation4 [shape = 'u8[4096]{0}', space=vmem, size = 0x1000, scoped, tag = 'input window, operand 1, single buffered']
    #allocation5 [shape = 's32[1]{0}', space=sflag, size = 0x4, scoped, tag = 'scoped memory for tpu_custom_call.1']
    #allocation6 [shape = 's32[1]{0}', space=sflag, size = 0x4, scoped, tag = 'scoped memory for tpu_custom_call.1']
    #allocation7 [shape = 'u8[4096]{0}', space=vmem, size = 0x1000, scoped, tag = 'output window, operand 0, single buffered']
    %11 = vsyncpa [#allocation5], 0
    %12 = vsyncpa [#allocation6], 0
    // Predicated region
    $region2: #{tpu_custom_call.1} parent=1 // pred_check
      _
    $region3: #{tpu_custom_call.1} parent=1 // pred_check_branch
      %14 = sbr.rel (0) target = $region5
    $region4: #{tpu_custom_call.1} parent=1 // pred_region
      %s16 = ssub.s32 128, 128
      %17 = vsyncadd [#allocation5], %s16
      %s19 = sshll.u32 [#allocation4], 4
      %s20 = int_to_ptr.vmem [resolvable:$true] %s19
      %22 = dma.hbm_to_vmem [thread:$0]  %s1, 128, %s20, [#allocation5]
    $region5: #{tpu_custom_call.1} parent=1 // pred_fallthru
      _
    // Predicated region
    $region6: #{tpu_custom_call.1} parent=1 // pred_check
      _
    $region7: #{tpu_custom_call.1} parent=1 // pred_check_branch
      %24 = sbr.rel (0) target = $region9
    $region8: #{tpu_custom_call.1} parent=1 // pred_region
      %25 = dma.done [#allocation5], 128
    $region9: #{tpu_custom_call.1} parent=1 // pred_fallthru
      _
    %s26 = sld [smem:[#allocation3]]
    %s27 = sld [smem:[#allocation3 + $0x1]]
    %v28 = vld [vmem:[#allocation4] sm:$0xff]
    %v29 = vstv %s27
    %v30 = vmul.f32 %v29, %v28
    %v31 = vstv %s26
    %v32 = vadd.f32 %v31, %v30
    %33 = vst [vmem:[#allocation7] sm:$0xff] %v32
    // Predicated region
    $region10: #{tpu_custom_call.1} parent=1 // pred_check
      _
    $region11: #{tpu_custom_call.1} parent=1 // pred_check_branch
      %35 = sbr.rel (0) target = $region13
    $region12: #{tpu_custom_call.1} parent=1 // pred_region
      %s37 = ssub.s32 128, 128
      %38 = vsyncadd [#allocation6], %s37
      %s40 = sshll.u32 [#allocation7], 4
      %s41 = int_to_ptr.vmem [resolvable:$true] %s40
      %43 = dma.vmem_to_hbm [thread:$0]  %s41, 128, %s2, [#allocation6]
    $region13: #{tpu_custom_call.1} parent=1 // pred_fallthru
      _
    // Predicated region
    $region14: #{tpu_custom_call.1} parent=1 // pred_check
      _
    $region15: #{tpu_custom_call.1} parent=1 // pred_check_branch
      %45 = sbr.rel (0) target = $region17
    $region16: #{tpu_custom_call.1} parent=1 // pred_region
      %46 = dma.done [#allocation6], 128
    $region17: #{tpu_custom_call.1} parent=1 // pred_fallthru
      _
    %47 = vsyncpa [#allocation5], 1
    %48 = vsyncpa [#allocation6], 1

</llo_original>
